<compile_context>
chip_gen: v5e
topology: v5e:2x2
jax: 0.10.0
libtpu: 0.0.40
codegen_flags: <defaults>
</compile_context>

<pallas_src>
import jax
import jax.numpy as jnp
from jax.experimental import pallas as pl
from jax.experimental.pallas import tpu as pltpu


def _mlp_kernel(x_ref, w1_ref, b1_ref, w2_ref, b2_ref, o_ref):
    """Whole forward pass for one batch tile: two MXU matmuls + ReLU, all f32."""
    x = x_ref[...].astype(jnp.float32)                       # x.float()
    # Layer 1: h = relu(x @ W1 + b1)   (W1 already in (obs, hidden) layout)
    h = jnp.dot(x, w1_ref[...], preferred_element_type=jnp.float32)
    h = jnp.maximum(h + b1_ref[...], 0.0)                    # b1 is (1, hidden)
    # Layer 2: o = h @ W2 + b2         (W2 already in (hidden, n_actions) layout)
    o = jnp.dot(h, w2_ref[...], preferred_element_type=jnp.float32)
    o_ref[...] = (o + b2_ref[...]).astype(o_ref.dtype)       # b2 is (1, n_actions)


def prepare_params(w1, b1, w2, b2):
    """One-time layout change (at param-init time, NOT per call).

    PyTorch-layout (out, in) weights -> (in, out); 1-D biases -> (1, n).
    """
    return (jnp.asarray(w1, jnp.float32).T,              # (obs, hidden)
            jnp.asarray(b1, jnp.float32).reshape(1, -1),  # (1, hidden)
            jnp.asarray(w2, jnp.float32).T,              # (hidden, n_actions)
            jnp.asarray(b2, jnp.float32).reshape(1, -1))  # (1, n_actions)


def net_forward(x, w1t, b1, w2t, b2, *, block_cap=2048):
    """Pallas wrapper.

    Args:
      x   : (B, obs_size)            input observations (any float dtype)
      w1t : (obs_size, hidden)       layer-1 weight, (in, out) layout (f32)
      b1  : (1, hidden)              layer-1 bias (f32)
      w2t : (hidden, n_actions)      layer-2 weight, (in, out) layout (f32)
      b2  : (1, n_actions)           layer-2 bias (f32)
      block_cap: max batch rows per grid step (rounded down to a multiple of 8).
    Returns:
      (B, n_actions) float32 logits.
    """
    B, obs = x.shape
    hidden = w1t.shape[1]
    n_actions = w2t.shape[1]

    if B <= block_cap:
        # Single grid step: block equals full array dims (always layout-legal),
        # no pipeline-step overhead.  This is the right choice on v5e/v6e
        # (one TC) and on v7x for small/medium rollout batches.
        bb, grid_b = B, 1
    else:
        # Large batches: tile the batch (sublane-legal multiple of 8).  The
        # last block may be partial; Pallas masks the partial output writes,
        # and the garbage rows read into the last x block never reach a
        # written output row.
        bb = max(8, (block_cap // 8) * 8)
        grid_b = pl.cdiv(B, bb)

    flops = 2 * B * (obs * hidden + hidden * n_actions)
    bytes_accessed = (
        x.size * x.dtype.itemsize
        + 4 * (w1t.size + b1.size + w2t.size + b2.size)
        + 4 * B * n_actions)  # logical sizes (scheduling hint only)

    return pl.pallas_call(
        _mlp_kernel,
        out_shape=jax.ShapeDtypeStruct((B, n_actions), jnp.float32),
        grid=(grid_b,),
        in_specs=[
            pl.BlockSpec((bb, obs), lambda i: (i, 0)),             # batch-tiled x
            pl.BlockSpec((obs, hidden), lambda i: (0, 0)),         # W1 (in,out), replicated
            pl.BlockSpec((1, hidden), lambda i: (0, 0)),           # b1, replicated
            pl.BlockSpec((hidden, n_actions), lambda i: (0, 0)),   # W2 (in,out), replicated
            pl.BlockSpec((1, n_actions), lambda i: (0, 0)),        # b2, replicated
        ],
        out_specs=pl.BlockSpec((bb, n_actions), lambda i: (i, 0)),
        compiler_params=pltpu.CompilerParams(
            dimension_semantics=("parallel",)),
        cost_estimate=pl.CostEstimate(
            flops=flops, transcendentals=0, bytes_accessed=bytes_accessed),
    )(x, w1t, b1, w2t, b2)


def _reference(x, w1, b1, w2, b2):
    """Pure-JAX reference matching torch semantics (PyTorch-layout params)."""
    x = x.astype(jnp.float32)
    h = jnp.maximum(x @ w1.T + b1, 0.0)
    return h @ w2.T + b2


if __name__ == "__main__":
    # CartPole-ish sizes: obs_size=4, hidden_size=32, n_actions=2.
    obs_size, hidden_size, n_actions = 4, 32, 2

    key = jax.random.PRNGKey(0)
    k_x, k_xb, k_w1, k_b1, k_w2, k_b2 = jax.random.split(key, 6)

    # Deterministic PyTorch-style uniform(-1/sqrt(fan_in), +1/sqrt(fan_in)) init.
    bound1 = 1.0 / jnp.sqrt(jnp.float32(obs_size))
    bound2 = 1.0 / jnp.sqrt(jnp.float32(hidden_size))
    w1 = jax.random.uniform(k_w1, (hidden_size, obs_size), jnp.float32, -bound1, bound1)
    b1 = jax.random.uniform(k_b1, (hidden_size,), jnp.float32, -bound1, bound1)
    w2 = jax.random.uniform(k_w2, (n_actions, hidden_size), jnp.float32, -bound2, bound2)
    b2 = jax.random.uniform(k_b2, (n_actions,), jnp.float32, -bound2, bound2)

    # One-time layout change (done at "init" time, not per forward call).
    w1t, b1p, w2t, b2p = prepare_params(w1, b1, w2, b2)

    # 1) Small batch -> single full-block grid step (per-step inference path).
    x_small = jax.random.normal(k_x, (8, obs_size), jnp.float32)
    out_small = jax.block_until_ready(net_forward(x_small, w1t, b1p, w2t, b2p))
    ref_small = _reference(x_small, w1, b1, w2, b2)
    assert out_small.shape == (8, n_actions)
    assert jnp.allclose(out_small, ref_small, atol=1e-5, rtol=1e-5), "small-batch mismatch"

    # 2) Ragged batch with a forced grid split (block_cap=128, B=300) to
    #    exercise the masked partial-edge-block path (no jnp.pad anywhere).
    x_big = jax.random.normal(k_xb, (300, obs_size), jnp.float32)
    out_big = jax.block_until_ready(net_forward(x_big, w1t, b1p, w2t, b2p, block_cap=128))
    ref_big = _reference(x_big, w1, b1, w2, b2)
    assert out_big.shape == (300, n_actions)
    assert jnp.allclose(out_big, ref_big, atol=1e-5, rtol=1e-5), "batched mismatch"

    print("KERNEL_OK")
</pallas_src>

<mosaic_0001>
module attributes {stable_mosaic.version = 11 : i64} {
  func.func @_mlp_kernel(%arg0: i32, %arg1: memref<8x4xf32, #tpu.memory_space<vmem>>, %arg2: memref<4x32xf32, #tpu.memory_space<vmem>>, %arg3: memref<1x32xf32, #tpu.memory_space<vmem>>, %arg4: memref<32x2xf32, #tpu.memory_space<vmem>>, %arg5: memref<1x2xf32, #tpu.memory_space<vmem>>, %arg6: memref<8x2xf32, #tpu.memory_space<vmem>>) attributes {dimension_semantics = [#tpu.dimension_semantics<parallel>], iteration_bounds = array<i64: 1>, scalar_prefetch = 0 : i64, scratch_operands = 0 : i64, tpu.core_type = #tpu.core_type<tc>, window_params = [{transform_indices = @transform_0, window_bounds = array<i64: 8, 4>}, {pipeline_mode = #tpu.pipeline_mode<synchronous>, transform_indices = @transform_1, window_bounds = array<i64: 4, 32>}, {pipeline_mode = #tpu.pipeline_mode<synchronous>, transform_indices = @transform_2, window_bounds = array<i64: 1, 32>}, {pipeline_mode = #tpu.pipeline_mode<synchronous>, transform_indices = @transform_3, window_bounds = array<i64: 32, 2>}, {pipeline_mode = #tpu.pipeline_mode<synchronous>, transform_indices = @transform_4, window_bounds = array<i64: 1, 2>}, {transform_indices = @transform_5, window_bounds = array<i64: 8, 2>}]} {
    %c0 = arith.constant 0 : index
    %c0_0 = arith.constant 0 : index
    %0 = vector.load %arg1[%c0, %c0_0] : memref<8x4xf32, #tpu.memory_space<vmem>>, vector<8x4xf32>
    %c0_1 = arith.constant 0 : index
    %c0_2 = arith.constant 0 : index
    %1 = vector.load %arg2[%c0_1, %c0_2] : memref<4x32xf32, #tpu.memory_space<vmem>>, vector<4x32xf32>
    %cst = arith.constant dense<0.000000e+00> : vector<8x32xf32>
    %2 = tpu.matmul %0, %1, %cst {dimension_numbers = #tpu.dot_dimension_numbers<[1], [0], [0], [1], [0, 0, 1, 1], [], []>} : vector<8x4xf32>, vector<4x32xf32>, vector<8x32xf32> -> vector<8x32xf32>
    %c0_3 = arith.constant 0 : index
    %c0_4 = arith.constant 0 : index
    %3 = vector.load %arg3[%c0_3, %c0_4] : memref<1x32xf32, #tpu.memory_space<vmem>>, vector<1x32xf32>
    %4 = vector.broadcast %3 : vector<1x32xf32> to vector<8x32xf32>
    %5 = arith.addf %2, %4 : vector<8x32xf32>
    %cst_5 = arith.constant 0.000000e+00 : f32
    %6 = vector.broadcast %cst_5 : f32 to vector<8x32xf32>
    %7 = arith.maximumf %5, %6 : vector<8x32xf32>
    %c0_6 = arith.constant 0 : index
    %c0_7 = arith.constant 0 : index
    %8 = vector.load %arg4[%c0_6, %c0_7] : memref<32x2xf32, #tpu.memory_space<vmem>>, vector<32x2xf32>
    %cst_8 = arith.constant dense<0.000000e+00> : vector<8x2xf32>
    %9 = tpu.matmul %7, %8, %cst_8 {dimension_numbers = #tpu.dot_dimension_numbers<[1], [0], [0], [1], [0, 0, 1, 1], [], []>} : vector<8x32xf32>, vector<32x2xf32>, vector<8x2xf32> -> vector<8x2xf32>
    %c0_9 = arith.constant 0 : index
    %c0_10 = arith.constant 0 : index
    %10 = vector.load %arg5[%c0_9, %c0_10] : memref<1x2xf32, #tpu.memory_space<vmem>>, vector<1x2xf32>
    %11 = vector.broadcast %10 : vector<1x2xf32> to vector<8x2xf32>
    %12 = arith.addf %9, %11 : vector<8x2xf32>
    %c0_11 = arith.constant 0 : index
    %c0_12 = arith.constant 0 : index
    %13 = vector.load %arg6[%c0_11, %c0_12] : memref<8x2xf32, #tpu.memory_space<vmem>>, vector<8x2xf32>
    tpu.vector_store %arg6[%c0_11, %c0_12], %12 {strides = array<i32>} : memref<8x2xf32, #tpu.memory_space<vmem>>, vector<8x2xf32>,
    return
  }
  func.func @transform_0(%arg0: i32) -> (i32, i32) {
    %c0_i32 = arith.constant 0 : i32
    %c0_i32_0 = arith.constant 0 : i32
    return %arg0, %c0_i32 : i32, i32
  }
  func.func @transform_1(%arg0: i32) -> (i32, i32) {
    %c0_i32 = arith.constant 0 : i32
    %c0_i32_0 = arith.constant 0 : i32
    %c0_i32_1 = arith.constant 0 : i32
    return %c0_i32, %c0_i32_0 : i32, i32
  }
  func.func @transform_2(%arg0: i32) -> (i32, i32) {
    %c0_i32 = arith.constant 0 : i32
    %c0_i32_0 = arith.constant 0 : i32
    %c0_i32_1 = arith.constant 0 : i32
    return %c0_i32, %c0_i32_0 : i32, i32
  }
  func.func @transform_3(%arg0: i32) -> (i32, i32) {
    %c0_i32 = arith.constant 0 : i32
    %c0_i32_0 = arith.constant 0 : i32
    %c0_i32_1 = arith.constant 0 : i32
    return %c0_i32, %c0_i32_0 : i32, i32
  }
  func.func @transform_4(%arg0: i32) -> (i32, i32) {
    %c0_i32 = arith.constant 0 : i32
    %c0_i32_0 = arith.constant 0 : i32
    %c0_i32_1 = arith.constant 0 : i32
    return %c0_i32, %c0_i32_0 : i32, i32
  }
  func.func @transform_5(%arg0: i32) -> (i32, i32) {
    %c0_i32 = arith.constant 0 : i32
    %c0_i32_0 = arith.constant 0 : i32
    return %arg0, %c0_i32 : i32, i32
  }
}

</mosaic_0001>

<llo_original>
// kernel: tpu_custom_call.1
$region0: #{tpu_custom_call.1}
  #allocation0 [shape = 'u32[]', space=smem, size = 0x4, offset = 0x4, fixed_abs, tag = 'smem constant byte address 0x4 - core index']
  #allocation1 [shape = 'u32[72,128]{1,0:T(1,128)}', space=vmem, size = 0x9000, scoped, tag = 'internal scratch']
  %s0 = inlined_call_operand.vmem [shape: f32[8,4], index: 0, kind: input, shape index: {}]
  %s1 = inlined_call_operand.vmem [shape: f32[4,32], index: 1, kind: input, shape index: {}]
  %s2 = inlined_call_operand.vmem [shape: f32[1,32], index: 2, kind: input, shape index: {}]
  %s3 = inlined_call_operand.vmem [shape: f32[32,2], index: 3, kind: input, shape index: {}]
  %s4 = inlined_call_operand.vmem [shape: f32[1,2], index: 4, kind: input, shape index: {}]
  %s5 = inlined_call_operand.vmem [shape: f32[8,2], index: 5, kind: output, shape index: {}]
  %s6 = sld [smem:[#allocation0]]
  $region30: #{tpu_custom_call.1} parent=0
    _
  %s8 = ssub.s32 1, %s6
  %s9 = scalar_select 0, %s8, %s6
  // Predicated region
  $region2: #{tpu_custom_call.1} parent=0 // pred_check
    _
  $region3: #{tpu_custom_call.1} parent=0 // pred_check_branch
    %11 = sbr.rel (0) target = $region5
  $region4: #{tpu_custom_call.1} parent=0 // pred_region
    _
  $region5: #{tpu_custom_call.1} parent=0 // pred_fallthru
    _
  // Predicated region
  $region6: #{tpu_custom_call.1} parent=0 // pred_check
    _
  $region7: #{tpu_custom_call.1} parent=0 // pred_check_branch
    %13 = sbr.rel (0) target = $region9
  $region8: #{tpu_custom_call.1} parent=0 // pred_region
    _
  $region9: #{tpu_custom_call.1} parent=0 // pred_fallthru
    _
  // Predicated region
  $region10: #{tpu_custom_call.1} parent=0 // pred_check
    _
  $region11: #{tpu_custom_call.1} parent=0 // pred_check_branch
    %15 = sbr.rel (0) target = $region13
  $region12: #{tpu_custom_call.1} parent=0 // pred_region
    _
  $region13: #{tpu_custom_call.1} parent=0 // pred_fallthru
    _
  // Predicated region
  $region14: #{tpu_custom_call.1} parent=0 // pred_check
    _
  $region15: #{tpu_custom_call.1} parent=0 // pred_check_branch
    %17 = sbr.rel (0) target = $region17
  $region16: #{tpu_custom_call.1} parent=0 // pred_region
    _
  $region17: #{tpu_custom_call.1} parent=0 // pred_fallthru
    _
  // Predicated region
  $region18: #{tpu_custom_call.1} parent=0 // pred_check
    _
  $region19: #{tpu_custom_call.1} parent=0 // pred_check_branch
    %19 = sbr.rel (0) target = $region21
  $region20: #{tpu_custom_call.1} parent=0 // pred_region
    _
  $region21: #{tpu_custom_call.1} parent=0 // pred_fallthru
    _
  %v20 = vld [vmem:[%s0] sm:$0xff]
  %v21 = vld [vmem:[%s1] sm:$0xf]
  %v22 = vld [vmem:[%s2] sm:$0x1]
  %v24 = vperm.slane %v22, 0
  %vm26 = vcmask 31744
  %v28 = vsel %vm26, %v20, 0
  %vm30 = vcmask 1043456
  %v32 = vsel %vm30, %v21, 0
  %34 = vmatpush.msra.mxu0 0.0
  %35 = vmatpush.msra.mxu0 0.0
  %36 = vmatpush.msra.mxu0 0.0
  %37 = vmatpush.msra.mxu0 0.0
  %38 = vmatpush.msra.mxu0 0.0
  %39 = vmatpush.msra.mxu0 0.0
  %40 = vmatpush.msra.mxu0 0.0
  %41 = vmatpush.msra.mxu0 0.0
  %42 = vmatpush.msra.mxu0 0.0
  %43 = vmatpush.msra.mxu0 0.0
  %44 = vmatpush.msra.mxu0 0.0
  %45 = vmatpush.msra.mxu0 0.0
  %46 = vmatpush.msra.mxu0 0.0
  %47 = vmatpush.msra.mxu0 0.0
  %48 = vmatpush.msra.mxu0 0.0
  %49 = vmatpush.msra.mxu0 %v32
  %50 = vmatmul.f32.gmra.mxu0 %v28
  %v51 = vpop.f32.mrf.mxu0
  %v52 = vadd.f32 %v24, %v51
  %53 = vdwg.mxu0
  %v54 = vmax.f32 %v52, 0.0
  %v55 = vld [vmem:[%s3] sm:$0xff]
  %v56 = vld [vmem:[%s3 + $0x8] sm:$0xff]
  %v57 = vld [vmem:[%s3 + $0x10] sm:$0xff]
  %v58 = vld [vmem:[%s3 + $0x18] sm:$0xff]
  %v59 = vld [vmem:[%s4] sm:$0x1]
  %v61 = vperm.slane %v59, 0
  %vm63 = vcmask 261120
  %v65 = vsel %vm63, %v54, 0
  %67 = vmatpush.msra.mxu0 0.0
  %68 = vmatpush.msra.mxu0 0.0
  %69 = vmatpush.msra.mxu0 0.0
  %70 = vmatpush.msra.mxu0 0.0
  %71 = vmatpush.msra.mxu0 0.0
  %72 = vmatpush.msra.mxu0 0.0
  %73 = vmatpush.msra.mxu0 0.0
  %74 = vmatpush.msra.mxu0 0.0
  %75 = vmatpush.msra.mxu0 0.0
  %76 = vmatpush.msra.mxu0 0.0
  %77 = vmatpush.msra.mxu0 0.0
  %78 = vmatpush.msra.mxu0 0.0
  %79 = vmatpush.msra.mxu0 %v58
  %80 = vmatpush.msra.mxu0 %v57
  %81 = vmatpush.msra.mxu0 %v56
  %82 = vmatpush.msra.mxu0 %v55
  %83 = vmatmul.f32.gmra.mxu0 %v65
  %v84 = vpop.f32.mrf.mxu0
  %v85 = vadd.f32 %v61, %v84
  %86 = vdwg.mxu0
  %vm87 = vcmask 15360
  %88 = vst.msk [vmem:[%s5] sm:$0xff] %vm87, %v85
  // Predicated region
  $region22: #{tpu_custom_call.1} parent=0 // pred_check
    _
  $region23: #{tpu_custom_call.1} parent=0 // pred_check_branch
    %90 = sbr.rel (0) target = $region25
  $region24: #{tpu_custom_call.1} parent=0 // pred_region
    _
  $region25: #{tpu_custom_call.1} parent=0 // pred_fallthru
    _
  // Predicated region
  $region26: #{tpu_custom_call.1} parent=0 // pred_check
    _
  $region27: #{tpu_custom_call.1} parent=0 // pred_check_branch
    %92 = sbr.rel (0) target = $region29
  $region28: #{tpu_custom_call.1} parent=0 // pred_region
    _
  $region29: #{tpu_custom_call.1} parent=0 // pred_fallthru
    _

</llo_original>
